<compile_context>
chip_gen: v7x
topology: tpu7x:2x2x1
jax: 0.10.0
libtpu: 0.0.40
codegen_flags: <defaults>
</compile_context>

<pallas_src>
import jax
import jax.numpy as jnp
from jax.experimental import pallas as pl
from jax.experimental.pallas import tpu as pltpu

HIDDEN = 128


def _round_up(n, m):
    return ((n + m - 1) // m) * m


def critic_kernel(x_ref, a_ref, w1x_ref, w1a_ref, b1_ref, w2_ref, b2_ref,
                  w3t_ref, b3_ref, out_ref):
    # fc1 (+ fused concat): h1 = relu(x @ W1x + a @ W1a + b1), f32 accumulate.
    h1 = jnp.dot(x_ref[...], w1x_ref[...], preferred_element_type=jnp.float32)
    h1 = h1 + jnp.dot(a_ref[...], w1a_ref[...], preferred_element_type=jnp.float32)
    h1 = jnp.maximum(h1 + b1_ref[...], 0.0)

    # fc2: bf16 MXU matmul, f32 accumulation; bias + ReLU in f32 on the VPU.
    h2 = jnp.dot(h1.astype(jnp.bfloat16), w2_ref[...],
                 preferred_element_type=jnp.float32)
    h2 = jnp.maximum(h2 + b2_ref[...], 0.0)

    # fc3 (out_dim = 1): VPU multiply + XLU lane reduction instead of an N=1
    # MXU matmul (keeps the MXU epilogue clear on v5e/v6e's sequential MRF).
    q = jnp.sum(h2 * w3t_ref[...], axis=-1, keepdims=True) + b3_ref[...]
    out_ref[...] = q.astype(out_ref.dtype)


def critic_forward(x, a, params, *, block_b=1024):
    """x: (B, n_states), a: (B, n_actions) -> q: (B, 1) float32."""
    w1x, w1a, b1, w2, b2, w3t, b3 = params
    B, n_states = x.shape
    n_actions = a.shape[1]

    # Batch tile: multiple of 8 sublanes.  Default 1024 rows keeps the
    # double-buffered (TB, *) tiles (lane-padded to 128) a few MiB, well inside
    # the scoped VMEM defaults of v5e (16 MiB) and v7x (32 MiB); raise
    # vmem_limit_bytes if you grow block_b past ~4096.
    TB = min(block_b, _round_up(B, 8))
    Bp = _round_up(B, TB)
    if Bp != B:
        x = jnp.pad(x, ((0, Bp - B), (0, 0)))
        a = jnp.pad(a, ((0, Bp - B), (0, 0)))

    # bf16 inputs halve HBM read traffic; matmuls accumulate in f32.
    x = x.astype(jnp.bfloat16)
    a = a.astype(jnp.bfloat16)

    batch_map = lambda i: (i, 0)
    const_map = lambda i: (0, 0)  # same block every step -> stays VMEM-resident

    out = pl.pallas_call(
        critic_kernel,
        out_shape=jax.ShapeDtypeStruct((Bp, 1), jnp.float32),
        grid=(Bp // TB,),
        in_specs=[
            pl.BlockSpec((TB, n_states), batch_map),     # x tile
            pl.BlockSpec((TB, n_actions), batch_map),    # a tile
            pl.BlockSpec((n_states, HIDDEN), const_map),   # W1x (bf16)
            pl.BlockSpec((n_actions, HIDDEN), const_map),  # W1a (bf16)
            pl.BlockSpec((1, HIDDEN), const_map),          # b1  (f32)
            pl.BlockSpec((HIDDEN, HIDDEN), const_map),     # W2  (bf16)
            pl.BlockSpec((1, HIDDEN), const_map),          # b2  (f32)
            pl.BlockSpec((1, HIDDEN), const_map),          # W3^T (f32)
            pl.BlockSpec((1, 1), const_map),               # b3  (f32)
        ],
        out_specs=pl.BlockSpec((TB, 1), batch_map),
        compiler_params=pltpu.CompilerParams(
            dimension_semantics=("parallel",),  # megacore sharding on v7x
        ),
    )(x, a, w1x, w1a, b1, w2, b2, w3t, b3)
    return out[:B]


def init_critic_params(key, n_states, n_actions, hidden=HIDDEN):
    """Deterministic synthetic params (shapes mirror the nn.Linear layers,
    weights stored transposed; fc1 weight split into x / a halves)."""
    k1, k2, k3, k4, k5, k6 = jax.random.split(key, 6)
    d_in = n_states + n_actions

    def unif(k, shape, fan_in):
        bound = 1.0 / jnp.sqrt(jnp.float32(fan_in))
        return jax.random.uniform(k, shape, jnp.float32, -bound, bound)

    w1 = unif(k1, (d_in, hidden), d_in)                  # fc1.weight^T
    w1x = w1[:n_states].astype(jnp.bfloat16)
    w1a = w1[n_states:].astype(jnp.bfloat16)
    b1 = unif(k2, (1, hidden), d_in)                     # fc1.bias (f32)
    w2 = unif(k3, (hidden, hidden), hidden).astype(jnp.bfloat16)  # fc2.weight^T
    b2 = unif(k4, (1, hidden), hidden)                   # fc2.bias (f32)
    w3t = unif(k5, (1, hidden), hidden)                  # fc3.weight (1, hidden), f32
    b3 = unif(k6, (1, 1), hidden)                        # fc3.bias (f32)
    return (w1x, w1a, b1, w2, b2, w3t, b3)


def critic_reference(x, a, params):
    """Pure-JAX reference reproducing the kernel's numerics (bf16 operands,
    f32 accumulation) for a tight correctness check."""
    w1x, w1a, b1, w2, b2, w3t, b3 = params
    xb = x.astype(jnp.bfloat16).astype(jnp.float32)
    ab = a.astype(jnp.bfloat16).astype(jnp.float32)
    h1 = xb @ w1x.astype(jnp.float32) + ab @ w1a.astype(jnp.float32) + b1
    h1 = jnp.maximum(h1, 0.0)
    h1b = h1.astype(jnp.bfloat16).astype(jnp.float32)
    h2 = jnp.maximum(h1b @ w2.astype(jnp.float32) + b2, 0.0)
    return jnp.sum(h2 * w3t, axis=-1, keepdims=True) + b3


if __name__ == "__main__":
    key = jax.random.PRNGKey(0)
    kx, ka, kp = jax.random.split(key, 3)

    B, n_states, n_actions = 8, 6, 2
    x = jax.random.normal(kx, (B, n_states), jnp.float32)
    a = jax.random.normal(ka, (B, n_actions), jnp.float32)
    params = init_critic_params(kp, n_states, n_actions)

    q = jax.block_until_ready(critic_forward(x, a, params))

    q_ref = critic_reference(x, a, params)
    assert q.shape == (B, 1)
    assert jnp.allclose(q, q_ref, atol=1e-3, rtol=1e-3), (
        f"max abs err = {jnp.max(jnp.abs(q - q_ref))}")
    print("KERNEL_OK")
</pallas_src>

<mosaic_0001>
module attributes {stable_mosaic.version = 11 : i64} {
  func.func @critic_kernel(%arg0: i32, %arg1: memref<8x6xbf16, #tpu.memory_space<vmem>>, %arg2: memref<8x2xbf16, #tpu.memory_space<vmem>>, %arg3: memref<6x128xbf16, #tpu.memory_space<vmem>>, %arg4: memref<2x128xbf16, #tpu.memory_space<vmem>>, %arg5: memref<1x128xf32, #tpu.memory_space<vmem>>, %arg6: memref<128x128xbf16, #tpu.memory_space<vmem>>, %arg7: memref<1x128xf32, #tpu.memory_space<vmem>>, %arg8: memref<1x128xf32, #tpu.memory_space<vmem>>, %arg9: memref<1x1xf32, #tpu.memory_space<vmem>>, %arg10: memref<8x1xf32, #tpu.memory_space<vmem>>) attributes {dimension_semantics = [#tpu.dimension_semantics<parallel>], iteration_bounds = array<i64: 1>, scalar_prefetch = 0 : i64, scratch_operands = 0 : i64, tpu.core_type = #tpu.core_type<tc>, window_params = [{transform_indices = @transform_0, window_bounds = array<i64: 8, 6>}, {transform_indices = @transform_1, window_bounds = array<i64: 8, 2>}, {pipeline_mode = #tpu.pipeline_mode<synchronous>, transform_indices = @transform_2, window_bounds = array<i64: 6, 128>}, {pipeline_mode = #tpu.pipeline_mode<synchronous>, transform_indices = @transform_3, window_bounds = array<i64: 2, 128>}, {pipeline_mode = #tpu.pipeline_mode<synchronous>, transform_indices = @transform_4, window_bounds = array<i64: 1, 128>}, {pipeline_mode = #tpu.pipeline_mode<synchronous>, transform_indices = @transform_5, window_bounds = array<i64: 128, 128>}, {pipeline_mode = #tpu.pipeline_mode<synchronous>, transform_indices = @transform_6, window_bounds = array<i64: 1, 128>}, {pipeline_mode = #tpu.pipeline_mode<synchronous>, transform_indices = @transform_7, window_bounds = array<i64: 1, 128>}, {pipeline_mode = #tpu.pipeline_mode<synchronous>, transform_indices = @transform_8, window_bounds = array<i64: 1, 1>}, {transform_indices = @transform_9, window_bounds = array<i64: 8, 1>}]} {
    %c0 = arith.constant 0 : index
    %c0_0 = arith.constant 0 : index
    %0 = vector.load %arg1[%c0, %c0_0] : memref<8x6xbf16, #tpu.memory_space<vmem>>, vector<8x6xbf16>
    %c0_1 = arith.constant 0 : index
    %c0_2 = arith.constant 0 : index
    %1 = vector.load %arg3[%c0_1, %c0_2] : memref<6x128xbf16, #tpu.memory_space<vmem>>, vector<6x128xbf16>
    %cst = arith.constant dense<0.000000e+00> : vector<8x128xf32>
    %2 = tpu.matmul %0, %1, %cst {dimension_numbers = #tpu.dot_dimension_numbers<[1], [0], [0], [1], [0, 0, 1, 1], [], []>} : vector<8x6xbf16>, vector<6x128xbf16>, vector<8x128xf32> -> vector<8x128xf32>
    %c0_3 = arith.constant 0 : index
    %c0_4 = arith.constant 0 : index
    %3 = vector.load %arg2[%c0_3, %c0_4] : memref<8x2xbf16, #tpu.memory_space<vmem>>, vector<8x2xbf16>
    %c0_5 = arith.constant 0 : index
    %c0_6 = arith.constant 0 : index
    %4 = vector.load %arg4[%c0_5, %c0_6] : memref<2x128xbf16, #tpu.memory_space<vmem>>, vector<2x128xbf16>
    %cst_7 = arith.constant dense<0.000000e+00> : vector<8x128xf32>
    %5 = tpu.matmul %3, %4, %cst_7 {dimension_numbers = #tpu.dot_dimension_numbers<[1], [0], [0], [1], [0, 0, 1, 1], [], []>} : vector<8x2xbf16>, vector<2x128xbf16>, vector<8x128xf32> -> vector<8x128xf32>
    %6 = arith.addf %2, %5 : vector<8x128xf32>
    %c0_8 = arith.constant 0 : index
    %c0_9 = arith.constant 0 : index
    %7 = vector.load %arg5[%c0_8, %c0_9] : memref<1x128xf32, #tpu.memory_space<vmem>>, vector<1x128xf32>
    %8 = vector.broadcast %7 : vector<1x128xf32> to vector<8x128xf32>
    %9 = arith.addf %6, %8 : vector<8x128xf32>
    %cst_10 = arith.constant 0.000000e+00 : f32
    %10 = vector.broadcast %cst_10 : f32 to vector<8x128xf32>
    %11 = arith.maximumf %9, %10 : vector<8x128xf32>
    %12 = arith.truncf %11 : vector<8x128xf32> to vector<8x128xbf16>
    %c0_11 = arith.constant 0 : index
    %c0_12 = arith.constant 0 : index
    %13 = vector.load %arg6[%c0_11, %c0_12] : memref<128x128xbf16, #tpu.memory_space<vmem>>, vector<128x128xbf16>
    %cst_13 = arith.constant dense<0.000000e+00> : vector<8x128xf32>
    %14 = tpu.matmul %12, %13, %cst_13 {dimension_numbers = #tpu.dot_dimension_numbers<[1], [0], [0], [1], [0, 0, 1, 1], [], []>} : vector<8x128xbf16>, vector<128x128xbf16>, vector<8x128xf32> -> vector<8x128xf32>
    %c0_14 = arith.constant 0 : index
    %c0_15 = arith.constant 0 : index
    %15 = vector.load %arg7[%c0_14, %c0_15] : memref<1x128xf32, #tpu.memory_space<vmem>>, vector<1x128xf32>
    %16 = vector.broadcast %15 : vector<1x128xf32> to vector<8x128xf32>
    %17 = arith.addf %14, %16 : vector<8x128xf32>
    %cst_16 = arith.constant 0.000000e+00 : f32
    %18 = vector.broadcast %cst_16 : f32 to vector<8x128xf32>
    %19 = arith.maximumf %17, %18 : vector<8x128xf32>
    %c0_17 = arith.constant 0 : index
    %c0_18 = arith.constant 0 : index
    %20 = vector.load %arg8[%c0_17, %c0_18] : memref<1x128xf32, #tpu.memory_space<vmem>>, vector<1x128xf32>
    %21 = vector.broadcast %20 : vector<1x128xf32> to vector<8x128xf32>
    %22 = arith.mulf %19, %21 : vector<8x128xf32>
    %cst_19 = arith.constant dense<0.000000e+00> : vector<8xf32>
    %23 = vector.multi_reduction <add>, %22, %cst_19 [1] : vector<8x128xf32> to vector<8xf32>
    %24 = vector.shape_cast %23 : vector<8xf32> to vector<8x1xf32>
    %c0_20 = arith.constant 0 : index
    %c0_21 = arith.constant 0 : index
    %25 = vector.load %arg9[%c0_20, %c0_21] : memref<1x1xf32, #tpu.memory_space<vmem>>, vector<1x1xf32>
    %26 = vector.broadcast %25 : vector<1x1xf32> to vector<8x1xf32>
    %27 = arith.addf %24, %26 : vector<8x1xf32>
    %c0_22 = arith.constant 0 : index
    %c0_23 = arith.constant 0 : index
    %28 = vector.load %arg10[%c0_22, %c0_23] : memref<8x1xf32, #tpu.memory_space<vmem>>, vector<8x1xf32>
    tpu.vector_store %arg10[%c0_22, %c0_23], %27 {strides = array<i32>} : memref<8x1xf32, #tpu.memory_space<vmem>>, vector<8x1xf32>,
    return
  }
  func.func @transform_0(%arg0: i32) -> (i32, i32) {
    %c0_i32 = arith.constant 0 : i32
    %c0_i32_0 = arith.constant 0 : i32
    return %arg0, %c0_i32 : i32, i32
  }
  func.func @transform_1(%arg0: i32) -> (i32, i32) {
    %c0_i32 = arith.constant 0 : i32
    %c0_i32_0 = arith.constant 0 : i32
    return %arg0, %c0_i32 : i32, i32
  }
  func.func @transform_2(%arg0: i32) -> (i32, i32) {
    %c0_i32 = arith.constant 0 : i32
    %c0_i32_0 = arith.constant 0 : i32
    %c0_i32_1 = arith.constant 0 : i32
    return %c0_i32, %c0_i32_0 : i32, i32
  }
  func.func @transform_3(%arg0: i32) -> (i32, i32) {
    %c0_i32 = arith.constant 0 : i32
    %c0_i32_0 = arith.constant 0 : i32
    %c0_i32_1 = arith.constant 0 : i32
    return %c0_i32, %c0_i32_0 : i32, i32
  }
  func.func @transform_4(%arg0: i32) -> (i32, i32) {
    %c0_i32 = arith.constant 0 : i32
    %c0_i32_0 = arith.constant 0 : i32
    %c0_i32_1 = arith.constant 0 : i32
    return %c0_i32, %c0_i32_0 : i32, i32
  }
  func.func @transform_5(%arg0: i32) -> (i32, i32) {
    %c0_i32 = arith.constant 0 : i32
    %c0_i32_0 = arith.constant 0 : i32
    %c0_i32_1 = arith.constant 0 : i32
    return %c0_i32, %c0_i32_0 : i32, i32
  }
  func.func @transform_6(%arg0: i32) -> (i32, i32) {
    %c0_i32 = arith.constant 0 : i32
    %c0_i32_0 = arith.constant 0 : i32
    %c0_i32_1 = arith.constant 0 : i32
    return %c0_i32, %c0_i32_0 : i32, i32
  }
  func.func @transform_7(%arg0: i32) -> (i32, i32) {
    %c0_i32 = arith.constant 0 : i32
    %c0_i32_0 = arith.constant 0 : i32
    %c0_i32_1 = arith.constant 0 : i32
    return %c0_i32, %c0_i32_0 : i32, i32
  }
  func.func @transform_8(%arg0: i32) -> (i32, i32) {
    %c0_i32 = arith.constant 0 : i32
    %c0_i32_0 = arith.constant 0 : i32
    %c0_i32_1 = arith.constant 0 : i32
    return %c0_i32, %c0_i32_0 : i32, i32
  }
  func.func @transform_9(%arg0: i32) -> (i32, i32) {
    %c0_i32 = arith.constant 0 : i32
    %c0_i32_0 = arith.constant 0 : i32
    return %arg0, %c0_i32 : i32, i32
  }
}

</mosaic_0001>

<llo_original>
// kernel: tpu_custom_call.1
$region0: #{tpu_custom_call.1}
  #allocation0 [shape = 'u32[]', space=smem, size = 0x4, offset = 0x4, fixed_abs, tag = 'smem constant byte address 0x4 - core index']
  #allocation1 [shape = 'u32[144,128]{1,0:T(1,128)}', space=vmem, size = 0x12000, scoped, tag = 'internal scratch']
  #allocation2 [shape = 'f32[1,1]{1,0:T(1,128)S(1)}', space=vmem, size = 0x200, scoped, tag = 'scoped memory for tpu_custom_call.1']
  %s0 = inlined_call_operand.vmem [shape: bf16[8,6], index: 0, kind: input, shape index: {}]
  %s1 = inlined_call_operand.vmem [shape: bf16[8,2], index: 1, kind: input, shape index: {}]
  %s2 = inlined_call_operand.vmem [shape: bf16[6,128], index: 2, kind: input, shape index: {}]
  %s3 = inlined_call_operand.vmem [shape: bf16[2,128], index: 3, kind: input, shape index: {}]
  %s4 = inlined_call_operand.vmem [shape: f32[1,128], index: 4, kind: input, shape index: {}]
  %s5 = inlined_call_operand.hbm [shape: bf16[128,128], index: 5, kind: input, shape index: {}]
  %s6 = inlined_call_operand.vmem [shape: f32[1,128], index: 6, kind: input, shape index: {}]
  %s7 = inlined_call_operand.vmem [shape: f32[1,128], index: 7, kind: input, shape index: {}]
  %s8 = inlined_call_operand.<no memory space> [shape: f32[1,1], index: 8, kind: input, shape index: {}]
  %s9 = inlined_call_operand.vmem [shape: f32[8,1], index: 9, kind: output, shape index: {}]
  %s10 = sld [smem:[#allocation0]]
  $region50: #{tpu_custom_call.1} parent=0
    _
  %s12 = ssub.s32 1, %s10
  %s13 = scalar_select 0, %s12, %s10
  %v14 = vstv %s8
  %15 = vst [vmem:[#allocation2] sm:$0x1] %v14
  $region1: #{tpu_custom_call.1} parent=0
    #allocation3 [shape = 'u8[32768]{0}', space=vmem, size = 0x8000, scoped, tag = 'input window, operand 5, single buffered']
    #allocation4 [shape = 's32[1]{0}', space=sflag, size = 0x4, scoped, tag = 'scoped memory for tpu_custom_call.1']
    %16 = vsyncpa [#allocation4], 0
    // Predicated region
    $region2: #{tpu_custom_call.1} parent=1 // pred_check
      _
    $region3: #{tpu_custom_call.1} parent=1 // pred_check_branch
      %18 = sbr.rel (0) target = $region5
    $region4: #{tpu_custom_call.1} parent=1 // pred_region
      _
    $region5: #{tpu_custom_call.1} parent=1 // pred_fallthru
      _
    // Predicated region
    $region6: #{tpu_custom_call.1} parent=1 // pred_check
      _
    $region7: #{tpu_custom_call.1} parent=1 // pred_check_branch
      %20 = sbr.rel (0) target = $region9
    $region8: #{tpu_custom_call.1} parent=1 // pred_region
      _
    $region9: #{tpu_custom_call.1} parent=1 // pred_fallthru
      _
    // Predicated region
    $region10: #{tpu_custom_call.1} parent=1 // pred_check
      _
    $region11: #{tpu_custom_call.1} parent=1 // pred_check_branch
      %22 = sbr.rel (0) target = $region13
    $region12: #{tpu_custom_call.1} parent=1 // pred_region
      _
    $region13: #{tpu_custom_call.1} parent=1 // pred_fallthru
      _
    // Predicated region
    $region14: #{tpu_custom_call.1} parent=1 // pred_check
      _
    $region15: #{tpu_custom_call.1} parent=1 // pred_check_branch
      %24 = sbr.rel (0) target = $region17
    $region16: #{tpu_custom_call.1} parent=1 // pred_region
      _
    $region17: #{tpu_custom_call.1} parent=1 // pred_fallthru
      _
    // Predicated region
    $region18: #{tpu_custom_call.1} parent=1 // pred_check
      _
    $region19: #{tpu_custom_call.1} parent=1 // pred_check_branch
      %26 = sbr.rel (0) target = $region21
    $region20: #{tpu_custom_call.1} parent=1 // pred_region
      _
    $region21: #{tpu_custom_call.1} parent=1 // pred_fallthru
      _
    // Predicated region
    $region22: #{tpu_custom_call.1} parent=1 // pred_check
      _
    $region23: #{tpu_custom_call.1} parent=1 // pred_check_branch
      %28 = sbr.rel (0) target = $region25
    $region24: #{tpu_custom_call.1} parent=1 // pred_region
      %s30 = ssub.s32 1024, 1024
      %31 = vsyncadd [#allocation4], %s30
      %s32 = sshll.u32 [#allocation3], 4
      %s33 = int_to_ptr.vmem [resolvable:$true] %s32
      %38 = dma.hbm_to_vmem [thread:$0]  %s5, 1024, %s33, [#allocation4], 64, 64, 4
    $region25: #{tpu_custom_call.1} parent=1 // pred_fallthru
      _
    // Predicated region
    $region26: #{tpu_custom_call.1} parent=1 // pred_check
      _
    $region27: #{tpu_custom_call.1} parent=1 // pred_check_branch
      %40 = sbr.rel (0) target = $region29
    $region28: #{tpu_custom_call.1} parent=1 // pred_region
      _
    $region29: #{tpu_custom_call.1} parent=1 // pred_fallthru
      _
    // Predicated region
    $region30: #{tpu_custom_call.1} parent=1 // pred_check
      _
    $region31: #{tpu_custom_call.1} parent=1 // pred_check_branch
      %42 = sbr.rel (0) target = $region33
    $region32: #{tpu_custom_call.1} parent=1 // pred_region
      _
    $region33: #{tpu_custom_call.1} parent=1 // pred_fallthru
      _
    // Predicated region
    $region34: #{tpu_custom_call.1} parent=1 // pred_check
      _
    $region35: #{tpu_custom_call.1} parent=1 // pred_check_branch
      %44 = sbr.rel (0) target = $region37
    $region36: #{tpu_custom_call.1} parent=1 // pred_region
      _
    $region37: #{tpu_custom_call.1} parent=1 // pred_fallthru
      _
    // Predicated region
    $region38: #{tpu_custom_call.1} parent=1 // pred_check
      _
    $region39: #{tpu_custom_call.1} parent=1 // pred_check_branch
      %46 = sbr.rel (0) target = $region41
    $region40: #{tpu_custom_call.1} parent=1 // pred_region
      %47 = dma.done [#allocation4], 1024
    $region41: #{tpu_custom_call.1} parent=1 // pred_fallthru
      _
    %v49 = vld [vmem:[%s0] sm:$0xf]
    %v50 = vld [vmem:[%s2] sm:$0x7]
    %v51 = vld [vmem:[%s1] sm:$0xf]
    %v52 = vld [vmem:[%s3] sm:$0x1]
    %vm53 = vcmask 15360
    %v55 = vsel %vm53, %v51, 0
    %vm57 = vcmask 1040384
    %v59 = vsel %vm57, %v52, 0
    %61 = vmatprep.subr.bf16.mxu0 0
    %62 = vmatpush1.bf16.msra.mxu0 %v59
    %63 = vmatprep.subr.bf16.mxu0 0
    %64 = vmatpush1.bf16.msra.mxu0 0
    %65 = vmatprep.subr.bf16.mxu0 0
    %66 = vmatpush1.bf16.msra.mxu0 0
    %67 = vmatprep.subr.bf16.mxu0 0
    %68 = vmatpush1.bf16.msra.mxu0 0
    %69 = vmatprep.subr.bf16.mxu0 0
    %70 = vmatpush1.bf16.msra.mxu0 0
    %71 = vmatprep.subr.bf16.mxu0 0
    %72 = vmatpush1.bf16.msra.mxu0 0
    %73 = vmatprep.subr.bf16.mxu0 0
    %74 = vmatpush1.bf16.msra.mxu0 0
    %75 = vmatprep.subr.bf16.mxu0 0
    %76 = vmatpush1.bf16.msra.mxu0 0
    %77 = vmatprep.subr.bf16.mxu0 0
    %78 = vmatpush1.bf16.msra.mxu0 0
    %79 = vmatprep.subr.bf16.mxu0 0
    %80 = vmatpush1.bf16.msra.mxu0 0
    %81 = vmatprep.subr.bf16.mxu0 0
    %82 = vmatpush1.bf16.msra.mxu0 0
    %83 = vmatprep.subr.bf16.mxu0 0
    %84 = vmatpush1.bf16.msra.mxu0 0
    %85 = vmatprep.subr.bf16.mxu0 0
    %86 = vmatpush1.bf16.msra.mxu0 0
    %87 = vmatprep.subr.bf16.mxu0 0
    %88 = vmatpush1.bf16.msra.mxu0 0
    %89 = vmatprep.subr.bf16.mxu0 0
    %90 = vmatpush1.bf16.msra.mxu0 0
    %91 = vmatprep.subr.bf16.mxu0 0
    %92 = vmatpush1.bf16.msra.mxu0 0
    %93 = vmatprep.mubr.bf16.mxu0 0
    %94 = vmatmul.mubr.bf16.gmra.mrb[0].mxu0 %v55
    %v95 = vpop.f32.mrb[0].mxu0
    %v96 = vadd.f32 0.0, %v95
    %v97 = vpop.f32.mrb[0].mxu0
    %v98 = vpop.f32.mrb[0].mxu0
    %v99 = vpop.f32.mrb[0].mxu0
    %100 = vdwg.mxu0
    %vm101 = vcmask 48128
    %v103 = vsel %vm101, %v49, 0
    %vm105 = vcmask 1042432
    %v107 = vsel %vm105, %v50, 0
    %109 = vmatprep.subr.bf16.mxu0 0
    %110 = vmatpush1.bf16.msra.mxu0 %v107
    %111 = vmatprep.subr.bf16.mxu0 0
    %112 = vmatpush1.bf16.msra.mxu0 0
    %113 = vmatprep.subr.bf16.mxu0 0
    %114 = vmatpush1.bf16.msra.mxu0 0
    %115 = vmatprep.subr.bf16.mxu0 0
    %116 = vmatpush1.bf16.msra.mxu0 0
    %117 = vmatprep.subr.bf16.mxu0 0
    %118 = vmatpush1.bf16.msra.mxu0 0
    %119 = vmatprep.subr.bf16.mxu0 0
    %120 = vmatpush1.bf16.msra.mxu0 0
    %121 = vmatprep.subr.bf16.mxu0 0
    %122 = vmatpush1.bf16.msra.mxu0 0
    %123 = vmatprep.subr.bf16.mxu0 0
    %124 = vmatpush1.bf16.msra.mxu0 0
    %125 = vmatprep.subr.bf16.mxu0 0
    %126 = vmatpush1.bf16.msra.mxu0 0
    %127 = vmatprep.subr.bf16.mxu0 0
    %128 = vmatpush1.bf16.msra.mxu0 0
    %129 = vmatprep.subr.bf16.mxu0 0
    %130 = vmatpush1.bf16.msra.mxu0 0
    %131 = vmatprep.subr.bf16.mxu0 0
    %132 = vmatpush1.bf16.msra.mxu0 0
    %133 = vmatprep.subr.bf16.mxu0 0
    %134 = vmatpush1.bf16.msra.mxu0 0
    %135 = vmatprep.subr.bf16.mxu0 0
    %136 = vmatpush1.bf16.msra.mxu0 0
    %137 = vmatprep.subr.bf16.mxu0 0
    %138 = vmatpush1.bf16.msra.mxu0 0
    %139 = vmatprep.subr.bf16.mxu0 0
    %140 = vmatpush1.bf16.msra.mxu0 0
    %141 = vmatprep.mubr.bf16.mxu0 0
    %142 = vmatmul.mubr.bf16.gmra.mrb[0].mxu0 %v103
    %v143 = vpop.f32.mrb[0].mxu0
    %v144 = vadd.f32 %v96, %v143
    %v145 = vpop.f32.mrb[0].mxu0
    %v146 = vpop.f32.mrb[0].mxu0
    %v147 = vpop.f32.mrb[0].mxu0
    %148 = vdwg.mxu0
    %v149 = vld [vmem:[%s4] sm:$0x1]
    %v151 = vlaneseq
    %v152 = vshrl.u32 %v151, 7
    %v153 = vsub.s32 0, %v152
    %v154 = vrot.slane %v149, %v153
    %v156 = vadd.f32 %v144, %v154
    %v157 = vmax.f32 %v156, 0.0
    %v158 = vpack.c.bf16 %v157, %v157
    %v159 = vld [vmem:[#allocation3] sm:$0xf]
    %v160 = vld [vmem:[#allocation3 + $0x4] sm:$0xf]
    %v161 = vld [vmem:[#allocation3 + $0x8] sm:$0xf]
    %v162 = vld [vmem:[#allocation3 + $0xc] sm:$0xf]
    %v163 = vld [vmem:[#allocation3 + $0x10] sm:$0xf]
    %v164 = vld [vmem:[#allocation3 + $0x14] sm:$0xf]
    %v165 = vld [vmem:[#allocation3 + $0x18] sm:$0xf]
    %v166 = vld [vmem:[#allocation3 + $0x1c] sm:$0xf]
    %v167 = vld [vmem:[#allocation3 + $0x20] sm:$0xf]
    %v168 = vld [vmem:[#allocation3 + $0x24] sm:$0xf]
    %v169 = vld [vmem:[#allocation3 + $0x28] sm:$0xf]
    %v170 = vld [vmem:[#allocation3 + $0x2c] sm:$0xf]
    %v171 = vld [vmem:[#allocation3 + $0x30] sm:$0xf]
    %v172 = vld [vmem:[#allocation3 + $0x34] sm:$0xf]
    %v173 = vld [vmem:[#allocation3 + $0x38] sm:$0xf]
    %v174 = vld [vmem:[#allocation3 + $0x3c] sm:$0xf]
    %v175 = vld [vmem:[%s6] sm:$0x1]
    %v177 = vlaneseq
    %v178 = vshrl.u32 %v177, 7
    %v179 = vsub.s32 0, %v178
    %v180 = vrot.slane %v175, %v179
    %v198 = vunpack.c.l.b16 %v159
    %v199 = vunpack.c.l.b16 %v160
    %v200 = vunpack.c.l.b16 %v161
    %v201 = vunpack.c.l.b16 %v162
    %v202 = vunpack.c.l.b16 %v163
    %v203 = vunpack.c.l.b16 %v164
    %v204 = vunpack.c.l.b16 %v165
    %v205 = vunpack.c.l.b16 %v166
    %v206 = vunpack.c.l.b16 %v167
    %v207 = vunpack.c.l.b16 %v168
    %v208 = vunpack.c.l.b16 %v169
    %v209 = vunpack.c.l.b16 %v170
    %v210 = vunpack.c.l.b16 %v171
    %v211 = vunpack.c.l.b16 %v172
    %v212 = vunpack.c.l.b16 %v173
    %v213 = vunpack.c.l.b16 %v174
    %v214 = vpack.c.b16 %v199, %v198
    %v215 = vpack.c.b16 %v201, %v200
    %v216 = vpack.c.b16 %v203, %v202
    %v217 = vpack.c.b16 %v205, %v204
    %v218 = vpack.c.b16 %v207, %v206
    %v219 = vpack.c.b16 %v209, %v208
    %v220 = vpack.c.b16 %v211, %v210
    %v221 = vpack.c.b16 %v213, %v212
    %230 = vmatprep.subr.bf16.mxu0 0
    %231 = vmatpush1.bf16.msra.mxu0 %v214
    %232 = vmatprep.subr.bf16.mxu0 0
    %233 = vmatpush1.bf16.msra.mxu0 %v215
    %234 = vmatprep.subr.bf16.mxu0 0
    %235 = vmatpush1.bf16.msra.mxu0 %v216
    %236 = vmatprep.subr.bf16.mxu0 0
    %237 = vmatpush1.bf16.msra.mxu0 %v217
    %238 = vmatprep.subr.bf16.mxu0 0
    %239 = vmatpush1.bf16.msra.mxu0 %v218
    %240 = vmatprep.subr.bf16.mxu0 0
    %241 = vmatpush1.bf16.msra.mxu0 %v219
    %242 = vmatprep.subr.bf16.mxu0 0
    %243 = vmatpush1.bf16.msra.mxu0 %v220
    %244 = vmatprep.subr.bf16.mxu0 0
    %245 = vmatpush1.bf16.msra.mxu0 %v221
    %246 = vmatprep.subr.bf16.mxu0 0
    %247 = vmatpush1.bf16.msra.mxu0 0
    %248 = vmatprep.subr.bf16.mxu0 0
    %249 = vmatpush1.bf16.msra.mxu0 0
    %250 = vmatprep.subr.bf16.mxu0 0
    %251 = vmatpush1.bf16.msra.mxu0 0
    %252 = vmatprep.subr.bf16.mxu0 0
    %253 = vmatpush1.bf16.msra.mxu0 0
    %254 = vmatprep.subr.bf16.mxu0 0
    %255 = vmatpush1.bf16.msra.mxu0 0
    %256 = vmatprep.subr.bf16.mxu0 0
    %257 = vmatpush1.bf16.msra.mxu0 0
    %258 = vmatprep.subr.bf16.mxu0 0
    %259 = vmatpush1.bf16.msra.mxu0 0
    %260 = vmatprep.subr.bf16.mxu0 0
    %261 = vmatpush1.bf16.msra.mxu0 0
    %262 = vmatprep.mubr.bf16.mxu0 0
    %263 = vmatmul.mubr.bf16.gmra.mrb[0].mxu0 %v158
    %v264 = vpop.f32.mrb[0].mxu0
    %v265 = vadd.f32 %v180, %v264
    %v266 = vpop.f32.mrb[0].mxu0
    %v267 = vpop.f32.mrb[0].mxu0
    %v268 = vpop.f32.mrb[0].mxu0
    %269 = vdwg.mxu0
    %v270 = vmax.f32 %v265, 0.0
    %v271 = vld [vmem:[%s7] sm:$0x1]
    %v273 = vlaneseq
    %v274 = vshrl.u32 %v273, 7
    %v275 = vsub.s32 0, %v274
    %v276 = vrot.slane %v271, %v275
    %v278 = vmul.f32 %v270, %v276
    %279 = vadd.xlane.f32.xlu0 %v278
    %v280 = vpop.xlane.xlu0 %279
    %v281 = vld [vmem:[#allocation2] sm:$0x1]
    %v283 = vlaneseq
    %v284 = vshrl.u32 %v283, 7
    %v285 = vsub.s32 0, %v284
    %v286 = vrot.slane %v281, %v285
    %v288 = vadd.f32 %v280, %v286
    %vm289 = vcmask 7168
    %290 = vst.msk [vmem:[%s9] sm:$0xff] %vm289, %v288
    // Predicated region
    $region42: #{tpu_custom_call.1} parent=1 // pred_check
      _
    $region43: #{tpu_custom_call.1} parent=1 // pred_check_branch
      %292 = sbr.rel (0) target = $region45
    $region44: #{tpu_custom_call.1} parent=1 // pred_region
      _
    $region45: #{tpu_custom_call.1} parent=1 // pred_fallthru
      _
    // Predicated region
    $region46: #{tpu_custom_call.1} parent=1 // pred_check
      _
    $region47: #{tpu_custom_call.1} parent=1 // pred_check_branch
      %294 = sbr.rel (0) target = $region49
    $region48: #{tpu_custom_call.1} parent=1 // pred_region
      _
    $region49: #{tpu_custom_call.1} parent=1 // pred_fallthru
      _
    %295 = vsyncpa [#allocation4], 1

</llo_original>
